<compile_context>
chip_gen: v7x
topology: tpu7x:2x2x1
jax: 0.10.0
libtpu: 0.0.40
codegen_flags: <defaults>
</compile_context>

<pallas_src>
import jax
import jax.numpy as jnp
from jax.experimental import pallas as pl
from jax.experimental.pallas import tpu as pltpu


def make_divisible(v, divisor=8, min_value=None):
    if min_value is None:
        min_value = divisor
    new_v = max(min_value, int(v + divisor / 2) // divisor * divisor)
    if new_v < 0.9 * v:
        new_v += divisor
    return new_v


def _divisor_tile(total, unit, max_tile):
    """Largest multiple-of-`unit` divisor of `total` that is <= max_tile.
    Falls back to the full extent if `total` is not a multiple of `unit`
    (a full-extent block is always legal)."""
    if total % unit != 0:
        return total
    best = unit
    t = unit
    limit = min(total, max(unit, max_tile))
    while t <= limit:
        if total % t == 0:
            best = t
        t += unit
    return best


def _pick_tiles(rows, hw, itemsize, budget_bytes=2 * 1024 * 1024):
    """Pick (row_tile, lane_tile) so one block is ~budget_bytes, lane-dense first."""
    max_lanes = max(128, (budget_bytes // (8 * itemsize)) // 128 * 128)
    thw = _divisor_tile(hw, 128, max_lanes)
    max_rows = max(8, (budget_bytes // max(1, thw * itemsize)) // 8 * 8)
    tr = _divisor_tile(rows, 8, max_rows)
    return tr, thw


def _sum_kernel(x_ref, sum_ref):
    # x_ref:   (tr, thw)  one row tile x one spatial tile
    # sum_ref: (tr, 1)    f32, resident across the spatial-tile grid axis
    @pl.when(pl.program_id(1) == 0)
    def _():
        sum_ref[...] = jnp.zeros_like(sum_ref)

    # Lane (XLU) reduction over the spatial tile, accumulated in f32.
    sum_ref[...] += jnp.sum(x_ref[...], axis=-1, keepdims=True, dtype=jnp.float32)


def _scale_kernel(x_ref, gate_ref, o_ref):
    # x_ref:    (tr, thw)
    # gate_ref: (tr, 1)   per-(batch, channel) gate, broadcast over lanes
    # o_ref:    (tr, thw) lane-dense store
    o_ref[...] = (x_ref[...] * gate_ref[...]).astype(o_ref.dtype)


def squeeze_excite(x_nchw, w1, b1, w2, b2):
    """x_nchw: (N, C, H, W). w1: (rd, C), b1: (rd,), w2: (C, rd), b2: (C,).
    Returns (N, C, H, W) — identical to the PyTorch SqueezeExcite.forward."""
    N, C, H, W = x_nchw.shape
    HW = H * W
    R = N * C

    x2 = x_nchw.reshape(R, HW)                       # zero-copy view of NCHW
    tr, thw = _pick_tiles(R, HW, jnp.dtype(x2.dtype).itemsize)
    n_r = R // tr
    n_t = HW // thw

    # --- pass 1: tiled spatial sum -> (N*C, 1) f32 ---
    sums = pl.pallas_call(
        _sum_kernel,
        out_shape=jax.ShapeDtypeStruct((R, 1), jnp.float32),
        grid_spec=pltpu.PrefetchScalarGridSpec(
            num_scalar_prefetch=0,
            grid=(n_r, n_t),
            in_specs=[pl.BlockSpec((tr, thw), lambda r, t: (r, t))],
            out_specs=pl.BlockSpec((tr, 1), lambda r, t: (r, 0)),
        ),
        compiler_params=pltpu.CompilerParams(
            dimension_semantics=("parallel", "arbitrary")),
    )(x2)

    # --- gate math for the whole batch (tiny; hoisted out of the grid) ---
    mean = sums.reshape(N, C) * jnp.float32(1.0 / HW)                    # (N, C)
    h = jnp.dot(mean, w1.T, preferred_element_type=jnp.float32) + b1     # (N, rd)
    h = jnp.maximum(h, 0.0)                                              # ReLU
    s = jnp.dot(h, w2.T, preferred_element_type=jnp.float32) + b2        # (N, C)
    gate = jnp.clip((s + 3.0) * (1.0 / 6.0), 0.0, 1.0)                   # Hardsigmoid
    gate = gate.astype(x2.dtype).reshape(R, 1)

    # --- pass 2: tiled elementwise excite: x * gate ---
    out = pl.pallas_call(
        _scale_kernel,
        out_shape=jax.ShapeDtypeStruct((R, HW), x_nchw.dtype),
        grid_spec=pltpu.PrefetchScalarGridSpec(
            num_scalar_prefetch=0,
            grid=(n_r, n_t),
            in_specs=[
                pl.BlockSpec((tr, thw), lambda r, t: (r, t)),
                pl.BlockSpec((tr, 1), lambda r, t: (r, 0)),
            ],
            out_specs=pl.BlockSpec((tr, thw), lambda r, t: (r, t)),
        ),
        compiler_params=pltpu.CompilerParams(
            dimension_semantics=("parallel", "parallel")),
    )(x2, gate)

    return out.reshape(N, C, H, W)


def _reference(x, w1, b1, w2, b2):
    # pure-JAX reference mirroring the PyTorch forward (NCHW)
    x_se = jnp.mean(x, axis=(2, 3), keepdims=True)                        # (N,C,1,1)
    x_se = jnp.einsum("nchw,rc->nrhw", x_se, w1) + b1[None, :, None, None]
    x_se = jnp.maximum(x_se, 0.0)
    x_se = jnp.einsum("nrhw,cr->nchw", x_se, w2) + b2[None, :, None, None]
    gate = jnp.clip((x_se + 3.0) / 6.0, 0.0, 1.0)                         # Hardsigmoid
    return x * gate


if __name__ == "__main__":
    N, C, H, W = 2, 4, 16, 16
    rd = make_divisible(C * 0.25, 8)  # -> 8 reduced channels

    key = jax.random.PRNGKey(0)
    k = jax.random.split(key, 5)
    x = jax.random.normal(k[0], (N, C, H, W), jnp.float32)
    # deterministic synthetic parameters (shapes from the module's __init__)
    w1 = jax.random.normal(k[1], (rd, C), jnp.float32) * 0.1   # conv_reduce weight (1x1)
    b1 = jax.random.normal(k[2], (rd,), jnp.float32) * 0.1     # conv_reduce bias
    w2 = jax.random.normal(k[3], (C, rd), jnp.float32) * 0.1   # conv_expand weight (1x1)
    b2 = jax.random.normal(k[4], (C,), jnp.float32) * 0.1      # conv_expand bias

    out = squeeze_excite(x, w1, b1, w2, b2)
    jax.block_until_ready(out)

    ref = _reference(x, w1, b1, w2, b2)
    assert out.shape == (N, C, H, W) and out.dtype == jnp.float32
    assert jnp.allclose(out, ref, atol=1e-5, rtol=1e-5), float(jnp.max(jnp.abs(out - ref)))
    print("KERNEL_OK")
</pallas_src>

<mosaic_0001>
module attributes {stable_mosaic.version = 11 : i64} {
  func.func @_sum_kernel(%arg0: i32, %arg1: i32, %arg2: memref<8x256xf32, #tpu.memory_space<vmem>>, %arg3: memref<8x1xf32, #tpu.memory_space<vmem>>) attributes {dimension_semantics = [#tpu.dimension_semantics<parallel>, #tpu.dimension_semantics<arbitrary>], iteration_bounds = array<i64: 1, 1>, scalar_prefetch = 0 : i64, scratch_operands = 0 : i64, tpu.core_type = #tpu.core_type<tc>, window_params = [{transform_indices = @transform_0, window_bounds = array<i64: 8, 256>}, {transform_indices = @transform_1, window_bounds = array<i64: 8, 1>}]} {
    %c0_i32 = arith.constant 0 : i32
    %0 = arith.cmpi eq, %arg1, %c0_i32 : i32
    %1 = arith.extui %0 : i1 to i32
    %c0_i32_0 = arith.constant 0 : i32
    %2 = arith.cmpi ne, %1, %c0_i32_0 : i32
    scf.if %2 {
      %cst_6 = arith.constant 0.000000e+00 : f32
      %9 = vector.broadcast %cst_6 : f32 to vector<8x1xf32>
      %c0_7 = arith.constant 0 : index
      %c0_8 = arith.constant 0 : index
      %10 = vector.load %arg3[%c0_7, %c0_8] : memref<8x1xf32, #tpu.memory_space<vmem>>, vector<8x1xf32>
      tpu.vector_store %arg3[%c0_7, %c0_8], %9 {strides = array<i32>} : memref<8x1xf32, #tpu.memory_space<vmem>>, vector<8x1xf32>,
    } else {
    }
    %c0 = arith.constant 0 : index
    %c0_1 = arith.constant 0 : index
    %3 = vector.load %arg3[%c0, %c0_1] : memref<8x1xf32, #tpu.memory_space<vmem>>, vector<8x1xf32>
    %c0_2 = arith.constant 0 : index
    %c0_3 = arith.constant 0 : index
    %4 = vector.load %arg2[%c0_2, %c0_3] : memref<8x256xf32, #tpu.memory_space<vmem>>, vector<8x256xf32>
    %cst = arith.constant dense<0.000000e+00> : vector<8xf32>
    %5 = vector.multi_reduction <add>, %4, %cst [1] : vector<8x256xf32> to vector<8xf32>
    %6 = vector.shape_cast %5 : vector<8xf32> to vector<8x1xf32>
    %7 = arith.addf %3, %6 : vector<8x1xf32>
    %c0_4 = arith.constant 0 : index
    %c0_5 = arith.constant 0 : index
    %8 = vector.load %arg3[%c0_4, %c0_5] : memref<8x1xf32, #tpu.memory_space<vmem>>, vector<8x1xf32>
    tpu.vector_store %arg3[%c0_4, %c0_5], %7 {strides = array<i32>} : memref<8x1xf32, #tpu.memory_space<vmem>>, vector<8x1xf32>,
    return
  }
  func.func @transform_0(%arg0: i32, %arg1: i32) -> (i32, i32) {
    %c0_i32 = arith.constant 0 : i32
    return %arg0, %arg1 : i32, i32
  }
  func.func @transform_1(%arg0: i32, %arg1: i32) -> (i32, i32) {
    %c0_i32 = arith.constant 0 : i32
    %c0_i32_0 = arith.constant 0 : i32
    return %arg0, %c0_i32 : i32, i32
  }
}

</mosaic_0001>

<llo_original>
// kernel: tpu_custom_call.1
$region0: #{tpu_custom_call.1}
  #allocation0 [shape = 'u32[]', space=smem, size = 0x4, offset = 0x4, fixed_abs, tag = 'smem constant byte address 0x4 - core index']
  #allocation1 [shape = 'u32[144,128]{1,0:T(1,128)}', space=vmem, size = 0x12000, scoped, tag = 'internal scratch']
  %s0 = inlined_call_operand.hbm [shape: f32[8,256], index: 0, kind: input, shape index: {}]
  %s1 = inlined_call_operand.vmem [shape: f32[8,1], index: 1, kind: output, shape index: {}]
  %s2 = sld [smem:[#allocation0]]
  $region22: #{tpu_custom_call.1} parent=0
    _
  %s4 = ssub.s32 1, %s2
  %s5 = scalar_select 0, %s4, %s2
  $region1: #{tpu_custom_call.1} parent=0
    #allocation2 [shape = 'u8[8192]{0}', space=vmem, size = 0x2000, scoped, tag = 'input window, operand 0, single buffered']
    #allocation3 [shape = 's32[1]{0}', space=sflag, size = 0x4, scoped, tag = 'scoped memory for tpu_custom_call.1']
    %6 = vsyncpa [#allocation3], 0
    // Predicated region
    $region2: #{tpu_custom_call.1} parent=1 // pred_check
      _
    $region3: #{tpu_custom_call.1} parent=1 // pred_check_branch
      %8 = sbr.rel (0) target = $region5
    $region4: #{tpu_custom_call.1} parent=1 // pred_region
      %s10 = ssub.s32 256, 256
      %11 = vsyncadd [#allocation3], %s10
      %s13 = sshll.u32 [#allocation2], 4
      %s14 = int_to_ptr.vmem [resolvable:$true] %s13
      %16 = dma.hbm_to_vmem [thread:$0]  %s0, 256, %s14, [#allocation3]
    $region5: #{tpu_custom_call.1} parent=1 // pred_fallthru
      _
    // Predicated region
    $region6: #{tpu_custom_call.1} parent=1 // pred_check
      _
    $region7: #{tpu_custom_call.1} parent=1 // pred_check_branch
      %18 = sbr.rel (0) target = $region9
    $region8: #{tpu_custom_call.1} parent=1 // pred_region
      %19 = dma.done [#allocation3], 256
    $region9: #{tpu_custom_call.1} parent=1 // pred_fallthru
      _
    %p20 = scmp.eq.s32.totalorder 0, 0
    // Predicated region
    $region10: #{tpu_custom_call.1} parent=1 // pred_check
      %p21 = pneg %p20
    $region11: #{tpu_custom_call.1} parent=1 // pred_check_branch
      %23 = sbr.rel (%p21) target = $region13
    $region12: #{tpu_custom_call.1} parent=1 // pred_region
      %vm24 = vcmask 7168
      %25 = vst.msk [vmem:[%s1] sm:$0xff] %vm24, 0.0
    $region13: #{tpu_custom_call.1} parent=1 // pred_fallthru
      _
    %v26 = vld [vmem:[%s1] sm:$0xff]
    %v27 = vld [vmem:[#allocation2] sm:$0xff]
    %v28 = vld [vmem:[#allocation2 + $0x8] sm:$0xff]
    %v29 = vadd.f32 %v27, %v28
    %30 = vadd.xlane.f32.xlu0 %v29
    %v31 = vpop.xlane.xlu0 %30
    %v32 = vadd.f32 %v26, %v31
    %vm33 = vcmask 7168
    %34 = vst.msk [vmem:[%s1] sm:$0xff] %vm33, %v32
    // Predicated region
    $region14: #{tpu_custom_call.1} parent=1 // pred_check
      _
    $region15: #{tpu_custom_call.1} parent=1 // pred_check_branch
      %36 = sbr.rel (0) target = $region17
    $region16: #{tpu_custom_call.1} parent=1 // pred_region
      _
    $region17: #{tpu_custom_call.1} parent=1 // pred_fallthru
      _
    // Predicated region
    $region18: #{tpu_custom_call.1} parent=1 // pred_check
      _
    $region19: #{tpu_custom_call.1} parent=1 // pred_check_branch
      %38 = sbr.rel (0) target = $region21
    $region20: #{tpu_custom_call.1} parent=1 // pred_region
      _
    $region21: #{tpu_custom_call.1} parent=1 // pred_fallthru
      _
    %39 = vsyncpa [#allocation3], 1

</llo_original>
